<compile_context>
chip_gen: v5e
topology: v5e:2x2
jax: 0.10.0
libtpu: 0.0.40
codegen_flags: <defaults>
</compile_context>

<pallas_src>
import jax
import jax.numpy as jnp
from jax.experimental import pallas as pl
from jax.experimental.pallas import tpu as pltpu

EPS = 1e-5  # PyTorch InstanceNorm1d default


def _round_up(n, m):
    return (n + m - 1) // m * m


def _vmem_limit_bytes():
    """Scoped-VMEM limit clamped to per-TensorCore capacity (safe on v7x)."""
    cap = 64 << 20  # v7x per-TC physical VMEM; never request above this
    try:
        cap = min(cap, int(pltpu.get_tpu_info().vmem_capacity_bytes))
    except Exception:
        pass
    return (cap * 3) // 4  # ~48 MiB on v5e/v6e/v7x


def _pick_channel_tile(c_pad, t, s_dim, x_isz, w_isz, batch, vmem_budget):
    """Channel tile: divisor of c_pad, multiple of 8, x-tile <= ~2 MiB, and
    enough grid steps to keep both v7x TensorCores fed."""
    divs = [d for d in range(8, c_pad + 1, 8) if c_pad % d == 0]

    def working_set(tc_):
        io = 2 * tc_ * t * (2 * x_isz)                       # x/out, double-buffered
        sty = 2 * s_dim * t * x_isz + (s_dim + 1) * t * x_isz  # style block + scratch
        wts = 2 * 2 * tc_ * (s_dim + 1) * w_isz              # stacked weight tile
        f32 = 6 * tc_ * t * 4                                # h + elementwise temps
        return io + sty + wts + f32

    def ok(d, need_steps):
        return (d * t * x_isz <= (2 << 20)
                and working_set(d) <= vmem_budget
                and batch * (c_pad // d) >= need_steps)

    for need_steps in (4, 2, 1):  # prefer >= 2 grid steps per v7x TensorCore
        cands = [d for d in divs if ok(d, need_steps)]
        if cands:
            return max(cands)
    # TODO(synk): T-axis tiling for extreme T where even tc=8 blows the budget.
    return 8


def adain1d_kernel(x_ref, s_ref, w_ref, o_ref, st_scr):
    # x_ref: (1, TC, T)   s_ref: (1, S, T)   w_ref: (1, 2*TC, S+1)
    # o_ref: (1, TC, T)   st_scr: (S+1, T) VMEM scratch (ones-augmented style)
    s_dim = s_ref.shape[1]
    t_dim = s_ref.shape[2]
    tc = x_ref.shape[1]

    # Ones-augmented style so the fc biases ride the MXU (no VPU bias adds).
    st_scr[:s_dim, :] = s_ref[0]
    st_scr[s_dim:, :] = jnp.ones((1, t_dim), dtype=st_scr.dtype)

    # Single fused style-Linear for both halves; the "+1" is folded into the
    # gamma bias column on the host, so h[:tc] is already (1 + gamma).
    h = jnp.dot(w_ref[0], st_scr[...], preferred_element_type=jnp.float32)  # (2TC, T)
    gamma1 = h[:tc]          # sublane-aligned slice (tc % 8 == 0)
    beta = h[tc:]

    # InstanceNorm1d statistics, one pass: the two reductions are independent.
    x = x_ref[0].astype(jnp.float32)                      # (TC, T), stats in f32
    inv_t = 1.0 / x.shape[-1]
    mean = jnp.sum(x, axis=-1, keepdims=True) * inv_t     # (TC, 1)
    ex2 = jnp.sum(x * x, axis=-1, keepdims=True) * inv_t
    var = jnp.maximum(ex2 - mean * mean, 0.0)             # guard tiny negatives

    scale = jax.lax.rsqrt(var + EPS) * gamma1             # rsqrt -> EUP slot
    o_ref[0] = ((x - mean) * scale + beta).astype(o_ref.dtype)


def adain1d(x, s, w, bias):
    """x: (B, C, T), s: (B, S, T), w: (2C, S), bias: (2C,). Returns (B, C, T)."""
    B, C, T = x.shape
    Bs, S, Ts = s.shape
    assert Bs == B and Ts == T and w.shape == (2 * C, S) and bias.shape == (2 * C,)

    # Host-side (C,)-vector folds: "+1" into the gamma bias; both biases become
    # the last column of the stacked weight so they ride the MXU.
    bias_f = bias.astype(jnp.float32)
    bg = (bias_f[:C] + 1.0).astype(w.dtype)
    bb = bias_f[C:].astype(w.dtype)
    wg, wb = w[:C], w[C:]

    vmem_limit = _vmem_limit_bytes()
    c_pad = _round_up(C, 8)  # no-op for production C (multiple of 8)
    tc = _pick_channel_tile(c_pad, T, S, x.dtype.itemsize, w.dtype.itemsize,
                            B, vmem_budget=(vmem_limit * 3) // 4)
    n_ct = c_pad // tc

    if c_pad != C:
        pc = c_pad - C
        x = jnp.pad(x, ((0, 0), (0, pc), (0, 0)))
        wg = jnp.pad(wg, ((0, pc), (0, 0)))
        wb = jnp.pad(wb, ((0, pc), (0, 0)))
        bg = jnp.pad(bg, (0, pc))
        bb = jnp.pad(bb, (0, pc))

    # Stacked per-tile weight: (n_ct, 2*tc, S+1) = [[wg | bg+1], [wb | bb]].
    w_stack = jnp.concatenate(
        [
            jnp.concatenate([wg.reshape(n_ct, tc, S), bg.reshape(n_ct, tc, 1)], axis=-1),
            jnp.concatenate([wb.reshape(n_ct, tc, S), bb.reshape(n_ct, tc, 1)], axis=-1),
        ],
        axis=1,
    )

    out = pl.pallas_call(
        adain1d_kernel,
        out_shape=jax.ShapeDtypeStruct((B, c_pad, T), x.dtype),
        grid_spec=pltpu.PrefetchScalarGridSpec(
            num_scalar_prefetch=0,
            grid=(B, n_ct),  # channel axis innermost: style DMA reused across c
            in_specs=[
                pl.BlockSpec((1, tc, T), lambda b, c: (b, c, 0)),           # x tile
                pl.BlockSpec((1, S, T), lambda b, c: (b, 0, 0)),            # style
                pl.BlockSpec((1, 2 * tc, S + 1), lambda b, c: (c, 0, 0)),   # weights
            ],
            out_specs=pl.BlockSpec((1, tc, T), lambda b, c: (b, c, 0)),
            scratch_shapes=[pltpu.VMEM((S + 1, T), s.dtype)],
        ),
        compiler_params=pltpu.CompilerParams(
            dimension_semantics=("parallel", "parallel"),
            vmem_limit_bytes=vmem_limit,
        ),
    )(x, s, w_stack)

    return out[:, :C, :] if c_pad != C else out


def adain1d_ref(x, s, w, bias):
    # Pure-JAX reference mirroring the PyTorch forward (accurate f32 math).
    h = jnp.einsum("bst,os->bot", s, w,
                   precision=jax.lax.Precision.HIGHEST) + bias[None, :, None]
    C = x.shape[1]
    gamma, beta = h[:, :C, :], h[:, C:, :]
    mean = jnp.mean(x, axis=-1, keepdims=True)
    var = jnp.mean((x - mean) ** 2, axis=-1, keepdims=True)
    xn = (x - mean) / jnp.sqrt(var + EPS)
    return (1.0 + gamma) * xn + beta


if __name__ == "__main__":
    B, C, T = 2, 4, 16        # batch, num_features, time
    S = 32                    # style_dim

    key = jax.random.PRNGKey(0)
    kx, ks, kw, kb = jax.random.split(key, 4)

    x = jax.random.normal(kx, (B, C, T), dtype=jnp.float32)
    s = jax.random.normal(ks, (B, S, T), dtype=jnp.float32)

    # nn.Linear(style_dim, 2*num_features) init-style params.
    bound = 1.0 / (S ** 0.5)
    w = jax.random.uniform(kw, (2 * C, S), jnp.float32, -bound, bound)
    bias = jax.random.uniform(kb, (2 * C,), jnp.float32, -bound, bound)

    # 1) Zero style-Linear: output must equal plain InstanceNorm1d. Tight f32
    #    check of the stats/affine path with no MXU rounding in play.
    w0 = jnp.zeros_like(w)
    b0 = jnp.zeros_like(bias)
    out0 = jax.block_until_ready(adain1d(x, s, w0, b0))
    ref0 = adain1d_ref(x, s, w0, b0)
    assert out0.shape == (B, C, T)
    assert jnp.allclose(out0, ref0, atol=1e-4, rtol=1e-4), "instance-norm path mismatch"

    # 2) Full f32 path. Tolerance sized for the MXU's f32-matmul input
    #    precision (the fc may run with bf16 operand passes); structural bugs
    #    would show up as O(1) errors and are still caught.
    out = jax.block_until_ready(adain1d(x, s, w, bias))
    ref = adain1d_ref(x, s, w, bias)
    assert out.shape == (B, C, T)
    assert jnp.allclose(out, ref, atol=2e-2, rtol=2e-2), "f32 mismatch vs reference"

    # 3) bf16 I/O path (production config: halves HBM bytes; stats stay f32).
    xb = x.astype(jnp.bfloat16)
    sb = s.astype(jnp.bfloat16)
    wb16 = w.astype(jnp.bfloat16)
    out_bf = jax.block_until_ready(adain1d(xb, sb, wb16, bias))
    ref_bf = adain1d_ref(xb.astype(jnp.float32), sb.astype(jnp.float32),
                         wb16.astype(jnp.float32), bias)
    assert out_bf.shape == (B, C, T) and out_bf.dtype == jnp.bfloat16
    assert jnp.allclose(out_bf.astype(jnp.float32), ref_bf, atol=5e-2, rtol=5e-2), \
        "bf16 mismatch vs reference"

    print("KERNEL_OK")
</pallas_src>

<mosaic_0001>
module attributes {stable_mosaic.version = 11 : i64} {
  func.func @adain1d_kernel(%arg0: i32, %arg1: i32, %arg2: memref<1x8x16xf32, #tpu.memory_space<vmem>>, %arg3: memref<1x32x16xf32, #tpu.memory_space<vmem>>, %arg4: memref<1x16x33xf32, #tpu.memory_space<vmem>>, %arg5: memref<1x8x16xf32, #tpu.memory_space<vmem>>, %arg6: memref<33x16xf32, #tpu.memory_space<vmem>>) attributes {dimension_semantics = [#tpu.dimension_semantics<parallel>, #tpu.dimension_semantics<parallel>], iteration_bounds = array<i64: 2, 1>, scalar_prefetch = 0 : i64, scratch_operands = 1 : i64, tpu.core_type = #tpu.core_type<tc>, window_params = [{transform_indices = @transform_0, window_bounds = array<i64: 1, 8, 16>}, {transform_indices = @transform_1, window_bounds = array<i64: 1, 32, 16>}, {transform_indices = @transform_2, window_bounds = array<i64: 1, 16, 33>}, {transform_indices = @transform_3, window_bounds = array<i64: 1, 8, 16>}]} {
    %c0 = arith.constant 0 : index
    %c0_0 = arith.constant 0 : index
    %c0_1 = arith.constant 0 : index
    %0 = vector.load %arg3[%c0, %c0_0, %c0_1] : memref<1x32x16xf32, #tpu.memory_space<vmem>>, vector<1x32x16xf32>
    %1 = vector.shape_cast %0 : vector<1x32x16xf32> to vector<32x16xf32>
    %c0_2 = arith.constant 0 : index
    %c0_3 = arith.constant 0 : index
    %2 = vector.load %arg6[%c0_2, %c0_3] : memref<33x16xf32, #tpu.memory_space<vmem>>, vector<32x16xf32>
    tpu.vector_store %arg6[%c0_2, %c0_3], %1 {strides = array<i32>} : memref<33x16xf32, #tpu.memory_space<vmem>>, vector<32x16xf32>,
    %cst = arith.constant 1.000000e+00 : f32
    %3 = vector.broadcast %cst : f32 to vector<1x16xf32>
    %c32 = arith.constant 32 : index
    %c0_4 = arith.constant 0 : index
    %4 = vector.load %arg6[%c32, %c0_4] : memref<33x16xf32, #tpu.memory_space<vmem>>, vector<1x16xf32>
    tpu.vector_store %arg6[%c32, %c0_4], %3 {strides = array<i32>} : memref<33x16xf32, #tpu.memory_space<vmem>>, vector<1x16xf32>,
    %c0_5 = arith.constant 0 : index
    %c0_6 = arith.constant 0 : index
    %c0_7 = arith.constant 0 : index
    %5 = vector.load %arg4[%c0_5, %c0_6, %c0_7] : memref<1x16x33xf32, #tpu.memory_space<vmem>>, vector<1x16x33xf32>
    %6 = vector.shape_cast %5 : vector<1x16x33xf32> to vector<16x33xf32>
    %c0_8 = arith.constant 0 : index
    %c0_9 = arith.constant 0 : index
    %7 = vector.load %arg6[%c0_8, %c0_9] : memref<33x16xf32, #tpu.memory_space<vmem>>, vector<33x16xf32>
    %cst_10 = arith.constant dense<0.000000e+00> : vector<16x16xf32>
    %8 = tpu.matmul %6, %7, %cst_10 {dimension_numbers = #tpu.dot_dimension_numbers<[1], [0], [0], [1], [0, 0, 1, 1], [], []>} : vector<16x33xf32>, vector<33x16xf32>, vector<16x16xf32> -> vector<16x16xf32>
    %9 = vector.extract_strided_slice %8 {offsets = [0, 0], sizes = [8, 16], strides = [1, 1]} : vector<16x16xf32> to vector<8x16xf32>
    %10 = vector.extract_strided_slice %8 {offsets = [8, 0], sizes = [8, 16], strides = [1, 1]} : vector<16x16xf32> to vector<8x16xf32>
    %c0_11 = arith.constant 0 : index
    %c0_12 = arith.constant 0 : index
    %c0_13 = arith.constant 0 : index
    %11 = vector.load %arg2[%c0_11, %c0_12, %c0_13] : memref<1x8x16xf32, #tpu.memory_space<vmem>>, vector<1x8x16xf32>
    %12 = vector.shape_cast %11 : vector<1x8x16xf32> to vector<8x16xf32>
    %cst_14 = arith.constant dense<0.000000e+00> : vector<8xf32>
    %13 = vector.multi_reduction <add>, %12, %cst_14 [1] : vector<8x16xf32> to vector<8xf32>
    %14 = vector.shape_cast %13 : vector<8xf32> to vector<8x1xf32>
    %cst_15 = arith.constant 6.250000e-02 : f32
    %15 = vector.broadcast %cst_15 : f32 to vector<8x1xf32>
    %16 = arith.mulf %14, %15 : vector<8x1xf32>
    %17 = arith.mulf %12, %12 : vector<8x16xf32>
    %cst_16 = arith.constant dense<0.000000e+00> : vector<8xf32>
    %18 = vector.multi_reduction <add>, %17, %cst_16 [1] : vector<8x16xf32> to vector<8xf32>
    %19 = vector.shape_cast %18 : vector<8xf32> to vector<8x1xf32>
    %cst_17 = arith.constant 6.250000e-02 : f32
    %20 = vector.broadcast %cst_17 : f32 to vector<8x1xf32>
    %21 = arith.mulf %19, %20 : vector<8x1xf32>
    %22 = arith.mulf %16, %16 : vector<8x1xf32>
    %23 = arith.subf %21, %22 : vector<8x1xf32>
    %cst_18 = arith.constant 0.000000e+00 : f32
    %24 = vector.broadcast %cst_18 : f32 to vector<8x1xf32>
    %25 = arith.maximumf %23, %24 : vector<8x1xf32>
    %cst_19 = arith.constant 9.99999974E-6 : f32
    %26 = vector.broadcast %cst_19 : f32 to vector<8x1xf32>
    %27 = arith.addf %25, %26 : vector<8x1xf32>
    %28 = math.rsqrt %27 : vector<8x1xf32>
    %29 = vector.broadcast %28 : vector<8x1xf32> to vector<8x16xf32>
    %30 = arith.mulf %29, %9 : vector<8x16xf32>
    %31 = vector.broadcast %16 : vector<8x1xf32> to vector<8x16xf32>
    %32 = arith.subf %12, %31 : vector<8x16xf32>
    %33 = arith.mulf %32, %30 : vector<8x16xf32>
    %34 = arith.addf %33, %10 : vector<8x16xf32>
    %c0_20 = arith.constant 0 : index
    %c0_21 = arith.constant 0 : index
    %c0_22 = arith.constant 0 : index
    %35 = vector.load %arg5[%c0_20, %c0_21, %c0_22] : memref<1x8x16xf32, #tpu.memory_space<vmem>>, vector<1x8x16xf32>
    %36 = vector.shape_cast %35 : vector<1x8x16xf32> to vector<8x16xf32>
    %37 = vector.shape_cast %34 : vector<8x16xf32> to vector<1x8x16xf32>
    tpu.vector_store %arg5[%c0_20, %c0_21, %c0_22], %37 {strides = array<i32>} : memref<1x8x16xf32, #tpu.memory_space<vmem>>, vector<1x8x16xf32>,
    return
  }
  func.func @transform_0(%arg0: i32, %arg1: i32) -> (i32, i32, i32) {
    %c0_i32 = arith.constant 0 : i32
    %c0_i32_0 = arith.constant 0 : i32
    return %arg0, %arg1, %c0_i32 : i32, i32, i32
  }
  func.func @transform_1(%arg0: i32, %arg1: i32) -> (i32, i32, i32) {
    %c0_i32 = arith.constant 0 : i32
    %c0_i32_0 = arith.constant 0 : i32
    %c0_i32_1 = arith.constant 0 : i32
    return %arg0, %c0_i32, %c0_i32_0 : i32, i32, i32
  }
  func.func @transform_2(%arg0: i32, %arg1: i32) -> (i32, i32, i32) {
    %c0_i32 = arith.constant 0 : i32
    %c0_i32_0 = arith.constant 0 : i32
    %c0_i32_1 = arith.constant 0 : i32
    return %arg1, %c0_i32, %c0_i32_0 : i32, i32, i32
  }
  func.func @transform_3(%arg0: i32, %arg1: i32) -> (i32, i32, i32) {
    %c0_i32 = arith.constant 0 : i32
    %c0_i32_0 = arith.constant 0 : i32
    return %arg0, %arg1, %c0_i32 : i32, i32, i32
  }
}

</mosaic_0001>

<llo_original>
// kernel: tpu_custom_call.1
$region0: #{tpu_custom_call.1}
  #allocation0 [shape = 'u32[]', space=smem, size = 0x4, offset = 0x4, fixed_abs, tag = 'smem constant byte address 0x4 - core index']
  #allocation1 [shape = 'u32[72,128]{1,0:T(1,128)}', space=vmem, size = 0x9000, scoped, tag = 'internal scratch']
  #allocation2 [shape = 'f32[33,16]{1,0:T(8,128)}', space=vmem, size = 0x5000, scoped, tag = 'scratch operand']
  %s0 = inlined_call_operand.vmem [shape: f32[2,8,16], index: 0, kind: input, shape index: {}]
  %s1 = inlined_call_operand.vmem [shape: f32[2,32,16], index: 1, kind: input, shape index: {}]
  %s2 = inlined_call_operand.vmem [shape: f32[1,16,33], index: 2, kind: input, shape index: {}]
  %s3 = inlined_call_operand.hbm [shape: f32[2,8,16], index: 3, kind: output, shape index: {}]
  %s4 = sld [smem:[#allocation0]]
  $region45: #{tpu_custom_call.1} parent=0
    _
  %s6 = ssub.s32 1, %s4
  %s7 = scalar_select 0, %s6, %s4
  $region1: #{tpu_custom_call.1} parent=0
    #allocation3 [shape = 'u8[8192]{0}', space=vmem, size = 0x2000, scoped, tag = 'output window, operand 0']
    #allocation4 [shape = 's32[2]{0}', space=sflag, size = 0x8, scoped, tag = 'scoped memory for tpu_custom_call.1']
    %8 = vsyncpa [#allocation4], 0
    %s9 = scalar_lea.sflag [#allocation4], 1
    %10 = vsyncpa %s9, 0
    loop: start=0, step=1, limit=4
    $region2: #{tpu_custom_call.1} parent=1 // loop_pre_header
      _
    $region3: #{tpu_custom_call.1} parent=1 // loop_header
      %s12 = sphi 0, %s16
      %p13 = scmp.ge.s32.totalorder %s12, 4
      %s19 = sphi 0, %s31
      %s20 = sphi 0, %s27
      %s21 = sphi 0, %s19
      %s22 = sphi 0, %s20
      %s23 = sphi 0, %s21
      %s24 = sphi 0, %s22
      %s36 = sphi 0, %s38
      %s39 = sphi 0, %s36
      %s40 = sphi 0, %s39
      %s56 = sphi 0, %s40
      %s62 = sphi 0, %s64
      %s65 = sphi 0, %s62
      %s66 = sphi 0, %s65
      %s82 = sphi 0, %s66
      %s88 = sphi 0, %s90
      %s91 = sphi 0, %s88
      %s92 = sphi 0, %s91
      %s108 = sphi 0, %s92
      %s116 = sphi 0, %s118
      %s119 = sphi 0, %s116
      %s120 = sphi 0, %s119
      %s136 = sphi 0, %s120
    $region4: #{tpu_custom_call.1} parent=1 // loop_header_branch
      %15 = sbr.rel (%p13) target = $region8
    $region5: #{tpu_custom_call.1} parent=1 // loop_body
      %s17 = ssub.s32 %s12, 1
      %s18 = ssub.s32 %s12, 2
      %s25 = sadd.s32 1, %s20
      %p26 = scmp.ge.s32.totalorder %s25, 1
      %s27 = scalar_select %p26, 0, %s25
      %s28 = sadd.s32 1, %s19
      %s29 = scalar_select %p26, %s28, %s19
      %p30 = scmp.ge.s32.totalorder %s29, 2
      %s31 = scalar_select %p30, 0, %s29
      %s32 = ssub.s32 %s19, %s31
      %s33 = ssub.s32 %s20, %s27
      %s34 = sor.u32 %s32, %s33
      %p35 = scmp.eq.s32.totalorder %s34, 0
      %s37 = sadd.s32 %s36, 1
      %s38 = scalar_select %p35, %s36, %s37
      %p41 = pneg %p35
      %p42 = scmp.eq.s32.totalorder %s12, 1
      %p43 = por %p41, %p42
      %p44 = scmp.ne.s32.totalorder %s36, %s39
      %p45 = scmp.eq.s32.totalorder %s12, 0
      %p46 = por %p44, %p45
      %p47 = scmp.ne.s32.totalorder %s36, %s39
      %p48 = scmp.eq.s32.totalorder %s17, 1
      %p49 = por %p47, %p48
      %p50 = scmp.ne.s32.totalorder %s39, %s40
      %p51 = scmp.eq.s32.totalorder %s17, 0
      %p52 = por %p50, %p51
      %p53 = scmp.ne.s32.totalorder %s39, %s40
      %p54 = scmp.eq.s32.totalorder %s18, 1
      %p55 = por %p53, %p54
      %p57 = scmp.ne.s32.totalorder %s40, %s56
      %p58 = scmp.eq.s32.totalorder %s18, 0
      %p59 = por %p57, %p58
      %s60 = ssub.s32 %s19, %s31
      %p61 = scmp.eq.s32.totalorder %s60, 0
      %s63 = sadd.s32 %s62, 1
      %s64 = scalar_select %p61, %s62, %s63
      %p67 = pneg %p61
      %p68 = scmp.eq.s32.totalorder %s12, 1
      %p69 = por %p67, %p68
      %p70 = scmp.ne.s32.totalorder %s62, %s65
      %p71 = scmp.eq.s32.totalorder %s12, 0
      %p72 = por %p70, %p71
      %p73 = scmp.ne.s32.totalorder %s62, %s65
      %p74 = scmp.eq.s32.totalorder %s17, 1
      %p75 = por %p73, %p74
      %p76 = scmp.ne.s32.totalorder %s65, %s66
      %p77 = scmp.eq.s32.totalorder %s17, 0
      %p78 = por %p76, %p77
      %p79 = scmp.ne.s32.totalorder %s65, %s66
      %p80 = scmp.eq.s32.totalorder %s18, 1
      %p81 = por %p79, %p80
      %p83 = scmp.ne.s32.totalorder %s66, %s82
      %p84 = scmp.eq.s32.totalorder %s18, 0
      %p85 = por %p83, %p84
      %s86 = ssub.s32 %s20, %s27
      %p87 = scmp.eq.s32.totalorder %s86, 0
      %s89 = sadd.s32 %s88, 1
      %s90 = scalar_select %p87, %s88, %s89
      %p93 = pneg %p87
      %p94 = scmp.eq.s32.totalorder %s12, 1
      %p95 = por %p93, %p94
      %p96 = scmp.ne.s32.totalorder %s88, %s91
      %p97 = scmp.eq.s32.totalorder %s12, 0
      %p98 = por %p96, %p97
      %p99 = scmp.ne.s32.totalorder %s88, %s91
      %p100 = scmp.eq.s32.totalorder %s17, 1
      %p101 = por %p99, %p100
      %p102 = scmp.ne.s32.totalorder %s91, %s92
      %p103 = scmp.eq.s32.totalorder %s17, 0
      %p104 = por %p102, %p103
      %p105 = scmp.ne.s32.totalorder %s91, %s92
      %p106 = scmp.eq.s32.totalorder %s18, 1
      %p107 = por %p105, %p106
      %p109 = scmp.ne.s32.totalorder %s92, %s108
      %p110 = scmp.eq.s32.totalorder %s18, 0
      %p111 = por %p109, %p110
      %s112 = ssub.s32 %s19, %s31
      %s113 = ssub.s32 %s20, %s27
      %s114 = sor.u32 %s112, %s113
      %p115 = scmp.eq.s32.totalorder %s114, 0
      %s117 = sadd.s32 %s116, 1
      %s118 = scalar_select %p115, %s116, %s117
      %p121 = pneg %p115
      %p122 = scmp.eq.s32.totalorder %s12, 1
      %p123 = por %p121, %p122
      %p124 = scmp.ne.s32.totalorder %s116, %s119
      %p125 = scmp.eq.s32.totalorder %s12, 0
      %p126 = por %p124, %p125
      %p127 = scmp.ne.s32.totalorder %s116, %s119
      %p128 = scmp.eq.s32.totalorder %s17, 1
      %p129 = por %p127, %p128
      %p130 = scmp.ne.s32.totalorder %s119, %s120
      %p131 = scmp.eq.s32.totalorder %s17, 0
      %p132 = por %p130, %p131
      %p133 = scmp.ne.s32.totalorder %s119, %s120
      %p134 = scmp.eq.s32.totalorder %s18, 1
      %p135 = por %p133, %p134
      %p137 = scmp.ne.s32.totalorder %s120, %s136
      %p138 = scmp.eq.s32.totalorder %s18, 0
      %p139 = por %p137, %p138
      %p140 = scmp.le.s32.totalorder 1, %s12
      %p141 = scmp.lt.s32.totalorder %s12, 3
      %p142 = pnand %p140, %p141
      %p143 = pneg %p142
      // Predicated region
      $region9: #{tpu_custom_call.1} parent=5 // pred_check
        _
      $region10: #{tpu_custom_call.1} parent=5 // pred_check_branch
        %145 = sbr.rel (%p142) target = $region12
      $region11: #{tpu_custom_call.1} parent=5 // pred_region
        %s146 = ssub.s32 %s12, 1
        // Predicated region
        $region13: #{tpu_custom_call.1} parent=11 // pred_check
          %p147 = pneg %p104
        $region14: #{tpu_custom_call.1} parent=11 // pred_check_branch
          %149 = sbr.rel (%p147) target = $region16
        $region15: #{tpu_custom_call.1} parent=11 // pred_region
          %p150 = scmp.lt.s32.totalorder %s22, 0
          %s151 = scalar_select %p150, %s22, 0
          %s152 = smul.addr %s151, 2
          %s153 = smul.addr %s152, 8
          %s154 = scalar_lea.vmem %s2, %s153
        $region16: #{tpu_custom_call.1} parent=11 // pred_fallthru
          _
      $region12: #{tpu_custom_call.1} parent=5 // pred_fallthru
        _
      %p155 = scmp.lt.s32.totalorder %s12, 2
      // Predicated region
      $region17: #{tpu_custom_call.1} parent=5 // pred_check
        %p156 = pneg %p155
      $region18: #{tpu_custom_call.1} parent=5 // pred_check_branch
        %158 = sbr.rel (%p156) target = $region20
      $region19: #{tpu_custom_call.1} parent=5 // pred_region
        // Predicated region
        $region21: #{tpu_custom_call.1} parent=19 // pred_check
          %p159 = pneg %p46
        $region22: #{tpu_custom_call.1} parent=19 // pred_check_branch
          %161 = sbr.rel (%p159) target = $region24
        $region23: #{tpu_custom_call.1} parent=19 // pred_region
          %p162 = scmp.lt.s32.totalorder %s19, 1
          %s163 = scalar_select %p162, %s19, 1
          %p164 = scmp.lt.s32.totalorder %s20, 0
          %s165 = scalar_select %p164, %s20, 0
          %s166 = sadd.s32 %s165, %s163
          %s167 = smul.addr %s166, 8
          %s168 = scalar_lea.vmem %s0, %s167
        $region24: #{tpu_custom_call.1} parent=19 // pred_fallthru
          _
        // Predicated region
        $region25: #{tpu_custom_call.1} parent=19 // pred_check
          %p169 = pneg %p72
        $region26: #{tpu_custom_call.1} parent=19 // pred_check_branch
          %171 = sbr.rel (%p169) target = $region28
        $region27: #{tpu_custom_call.1} parent=19 // pred_region
          %p172 = scmp.lt.s32.totalorder %s19, 1
          %s173 = scalar_select %p172, %s19, 1
          %s174 = smul.addr %s173, 4
          %s175 = smul.addr %s174, 8
          %s176 = scalar_lea.vmem %s1, %s175
        $region28: #{tpu_custom_call.1} parent=19 // pred_fallthru
          _
      $region20: #{tpu_custom_call.1} parent=5 // pred_fallthru
        _
      %p177 = scmp.le.s32.totalorder 1, %s12
      %p178 = scmp.lt.s32.totalorder %s12, 3
      %p179 = pnand %p177, %p178
      %p180 = pneg %p179
      // Predicated region
      $region29: #{tpu_custom_call.1} parent=5 // pred_check
        _
      $region30: #{tpu_custom_call.1} parent=5 // pred_check_branch
        %182 = sbr.rel (%p179) target = $region32
      $region31: #{tpu_custom_call.1} parent=5 // pred_region
        %s183 = ssub.s32 %s12, 1
        %p184 = scmp.lt.s32.totalorder %s21, 1
        %s185 = scalar_select %p184, %s21, 1
        %p186 = scmp.lt.s32.totalorder %s22, 0
        %s187 = scalar_select %p186, %s22, 0
        %s188 = sadd.s32 %s187, %s185
        %s189 = smul.addr %s188, 8
        %s190 = scalar_lea.vmem %s0, %s189
        %p191 = pneg %p52
        %p192 = pneg %p49
        %p193 = scmp.lt.s32.totalorder %s21, 1
        %s194 = scalar_select %p193, %s21, 1
        %s195 = smul.addr %s194, 4
        %s196 = smul.addr %s195, 8
        %s197 = scalar_lea.vmem %s1, %s196
        %p198 = pneg %p78
        %p199 = pneg %p75
        %p200 = scmp.lt.s32.totalorder %s22, 0
        %s201 = scalar_select %p200, %s22, 0
        %s202 = smul.addr %s201, 2
        %s203 = smul.addr %s202, 8
        %s204 = scalar_lea.vmem %s2, %s203
        %p205 = pneg %p104
        %p206 = pneg %p101
        %p207 = pneg %p132
        %p208 = pneg %p129
        %s209 = sand.u32 %s119, 1
        %s210 = scalar_lea.sflag [#allocation4], %s209
        %s211 = sand.u32 %s119, 1
        %s212 = smul.addr %s211, 8
        %s213 = scalar_lea.vmem [#allocation3], %s212
        %p214 = scmp.lt.s32.totalorder %s21, 1
        %s215 = scalar_select %p214, %s21, 1
        %p216 = scmp.lt.s32.totalorder %s22, 0
        %s217 = scalar_select %p216, %s22, 0
        %s218 = sadd.s32 %s217, %s215
        %s219 = smul.addr %s218, 8
        %s220 = scalar_lea.vmem %s0, %s219
        %p221 = scmp.lt.s32.totalorder %s21, 1
        %s222 = scalar_select %p221, %s21, 1
        %s223 = smul.addr %s222, 4
        %s224 = smul.addr %s223, 8
        %s225 = scalar_lea.vmem %s1, %s224
        %p226 = scmp.lt.s32.totalorder %s22, 0
        %s227 = scalar_select %p226, %s22, 0
        %s228 = smul.addr %s227, 2
        %s229 = smul.addr %s228, 8
        %s230 = scalar_lea.vmem %s2, %s229
        %v231 = vld [vmem:[%s225] sm:$0xff]
        %v232 = vld [vmem:[%s225 + $0x8] sm:$0xff]
        %v233 = vld [vmem:[%s225 + $0x10] sm:$0xff]
        %v234 = vld [vmem:[%s225 + $0x18] sm:$0xff]
        %vm235 = vcmask 130048
        %236 = vst.msk [vmem:[#allocation2] sm:$0xff] %vm235, %v231
        %237 = vst.msk [vmem:[#allocation2 + $0x8] sm:$0xff] %vm235, %v232
        %238 = vst.msk [vmem:[#allocation2 + $0x10] sm:$0xff] %vm235, %v233
        %239 = vst.msk [vmem:[#allocation2 + $0x18] sm:$0xff] %vm235, %v234
        %vm240 = vcmask 122880
        %241 = vst.msk [vmem:[#allocation2 + $0x20] sm:$0x1] %vm240, 1.0
        %v242 = vld [vmem:[%s230] sm:$0xff]
        %v243 = vld [vmem:[%s230 + $0x8] sm:$0xff]
        %v244 = vld [vmem:[#allocation2] sm:$0xff]
        %v245 = vld [vmem:[#allocation2 + $0x8] sm:$0xff]
        %v246 = vld [vmem:[#allocation2 + $0x10] sm:$0xff]
        %v247 = vld [vmem:[#allocation2 + $0x18] sm:$0xff]
        %v248 = vld [vmem:[#allocation2 + $0x20] sm:$0x1]
        %vm249 = vcmask 269312
        %v251 = vsel %vm249, %v242, 0
        %v254 = vsel %vm249, %v243, 0
        %vm256 = vcmask 1040384
        %v258 = vsel %vm256, %v248, 0
        %260 = vmatpush.msra.mxu0 0.0
        %261 = vmatpush.msra.mxu0 0.0
        %262 = vmatpush.msra.mxu0 0.0
        %263 = vmatpush.msra.mxu0 0.0
        %264 = vmatpush.msra.mxu0 0.0
        %265 = vmatpush.msra.mxu0 0.0
        %266 = vmatpush.msra.mxu0 0.0
        %267 = vmatpush.msra.mxu0 0.0
        %268 = vmatpush.msra.mxu0 0.0
        %269 = vmatpush.msra.mxu0 0.0
        %270 = vmatpush.msra.mxu0 0.0
        %271 = vmatpush.msra.mxu0 %v258
        %272 = vmatpush.msra.mxu0 %v247
        %273 = vmatpush.msra.mxu0 %v246
        %274 = vmatpush.msra.mxu0 %v245
        %275 = vmatpush.msra.mxu0 %v244
        %276 = vmatmul.f32.gmra.mxu0 %v251
        %v277 = vpop.f32.mrf.mxu0
        %v278 = vadd.f32 0.0, %v277
        %279 = vmatmul.f32.gmra.mxu0 %v254
        %v280 = vpop.f32.mrf.mxu0
        %v281 = vadd.f32 0.0, %v280
        %282 = vdwg.mxu0
        %v283 = vld [vmem:[%s220] sm:$0xff]
        %v284 = vsel %vm235, %v283, 0.0
        %285 = vadd.xlane.f32.xlu0 %v284
        %v286 = vpop.xlane.xlu0 %285
        %v287 = vmul.f32 %v286, 0.0625
        %v288 = vmul.f32 %v283, %v283
        %v289 = vsel %vm235, %v288, 0.0
        %290 = vadd.xlane.f32.xlu0 %v289
        %v291 = vpop.xlane.xlu0 %290
        %v292 = vmul.f32 %v291, 0.0625
        %v293 = vmul.f32 %v287, %v287
        %v294 = vsub.f32 %v292, %v293
        %v295 = vmax.f32 %v294, 0.0
        %v296 = vadd.f32 %v295, 1e-05
        %v297 = vrsqrt.pop %v296
        %v298 = vmul.f32 %v297, %v296
        %v299 = vmul.f32 %v298, %v297
        %v300 = vmul.f32 0.5, %v299
        %v301 = vsub.f32 1.5, %v300
        %v302 = vmul.f32 %v297, %v301
        %vm303 = vweird.f32 %v296
        %vm304 = vweird.f32 %v297
        %vm305 = vmor %vm303, %vm304
        %v306 = vsel %vm305, %v297, %v302
        %v307 = vmul.f32 %v306, %v278
        %v308 = vsub.f32 %v283, %v287
        %v309 = vmul.f32 %v308, %v307
        %v310 = vadd.f32 %v309, %v281
        %311 = vst.msk [vmem:[%s213] sm:$0xff] %vm235, %v310
        %s312 = sand.u32 %s119, 1
        %s313 = scalar_lea.sflag [#allocation4], %s312
        %s314 = sand.u32 %s119, 1
        %s315 = smul.addr %s314, 8
        %s316 = scalar_lea.vmem [#allocation3], %s315
        // Predicated region
        $region33: #{tpu_custom_call.1} parent=31 // pred_check
          %p317 = pneg %p129
        $region34: #{tpu_custom_call.1} parent=31 // pred_check_branch
          %319 = sbr.rel (%p317) target = $region36
        $region35: #{tpu_custom_call.1} parent=31 // pred_region
          %321 = vsyncadd %s313, 0
          %s322 = sadd.s32 %s22, %s21
          %s323 = smul.addr %s322, 8
          %s324 = scalar_lea.hbm %s3, %s323
          %s326 = sshll.u32 %s316, 4
          %s327 = int_to_ptr.vmem [resolvable:$true] %s326
          %s328 = sshll.u32 %s324, 4
          %s329 = int_to_ptr.hbm [resolvable:$true] %s328
          %331 = dma.vmem_to_hbm [thread:$0]  %s327, 128, %s329, %s313
        $region36: #{tpu_custom_call.1} parent=31 // pred_fallthru
          _
      $region32: #{tpu_custom_call.1} parent=5 // pred_fallthru
        _
      %p332 = scmp.le.s32.totalorder 2, %s12
      // Predicated region
      $region37: #{tpu_custom_call.1} parent=5 // pred_check
        %p333 = pneg %p332
      $region38: #{tpu_custom_call.1} parent=5 // pred_check_branch
        %335 = sbr.rel (%p333) target = $region40
      $region39: #{tpu_custom_call.1} parent=5 // pred_region
        %s336 = ssub.s32 %s12, 2
        // Predicated region
        $region41: #{tpu_custom_call.1} parent=39 // pred_check
          %p337 = pneg %p135
        $region42: #{tpu_custom_call.1} parent=39 // pred_check_branch
          %339 = sbr.rel (%p337) target = $region44
        $region43: #{tpu_custom_call.1} parent=39 // pred_region
          %s340 = sand.u32 %s120, 1
          %s341 = scalar_lea.sflag [#allocation4], %s340
          %s342 = sand.u32 %s120, 1
          %s343 = smul.addr %s342, 8
          %s344 = scalar_lea.vmem [#allocation3], %s343
          %346 = dma.done %s341, 128
        $region44: #{tpu_custom_call.1} parent=39 // pred_fallthru
          _
      $region40: #{tpu_custom_call.1} parent=5 // pred_fallthru
        _
    $region6: #{tpu_custom_call.1} parent=1 // loop_footer
      %s16 = sadd.s32 1, %s12
    $region7: #{tpu_custom_call.1} parent=1 // loop_footer_branch
      %11 = sbr.rel target = $region3
    $region8: #{tpu_custom_call.1} parent=1 // loop_exit
      _
    %347 = vsyncpa [#allocation4], 1
    %s348 = scalar_lea.sflag [#allocation4], 1
    %349 = vsyncpa %s348, 1

</llo_original>
